<compile_context>
chip_gen: v6e
topology: v6e:2x2x1
jax: 0.10.0
libtpu: 0.0.40
codegen_flags: <defaults>
</compile_context>

<pallas_src>
import functools

import jax
import jax.numpy as jnp
from jax.experimental import pallas as pl
from jax.experimental.pallas import tpu as pltpu


def _sparse_attention_kernel(x_ref, o_ref, *, top_k: int):
    """One block of rows: k-th largest per row (with duplicates), threshold, renormalize."""
    eps = jnp.float32(1e-7)
    neg_inf = jnp.float32(-jnp.inf)
    k_f = jnp.float32(top_k)

    x = x_ref[...].astype(jnp.float32)            # (bm, T)
    bm = x.shape[0]

    # Count-based knock-out: each iteration removes *all* ties of the current
    # row max and latches delta once the cumulative removed count reaches k.
    # This reproduces torch.topk's k-th value (duplicates counted) exactly.
    work = x
    removed = jnp.zeros((bm, 1), jnp.float32)     # values knocked out so far
    found = jnp.zeros((bm, 1), jnp.bool_)         # delta latched for this row?
    delta_val = jnp.zeros((bm, 1), jnp.float32)

    for it in range(top_k):
        row_max = jnp.max(work, axis=1, keepdims=True)                     # (bm, 1)
        is_max = work == row_max                                           # (bm, T)
        cnt = jnp.sum(jnp.where(is_max, 1.0, 0.0), axis=1, keepdims=True)  # (bm, 1)
        hit = jnp.logical_and(jnp.logical_not(found), (removed + cnt) >= k_f)
        delta_val = jnp.where(hit, row_max, delta_val)
        found = jnp.logical_or(found, hit)
        if it < top_k - 1:
            work = jnp.where(is_max, neg_inf, work)
            removed = removed + cnt

    delta = delta_val + eps                                                # (bm, 1)

    attn_w = jnp.maximum(x - delta, 0.0)                                   # clamp(min=0)
    attn_w_sum = jnp.sum(attn_w, axis=1, keepdims=True) + eps              # (bm, 1)
    inv = pl.reciprocal(attn_w_sum, approx=False)                          # per-row, EUP
    o_ref[...] = (attn_w * inv).astype(o_ref.dtype)


def _choose_bm(B: int, T: int) -> int:
    """Row-tile size: as large as fits a conservative VMEM block budget, multiple of 8."""
    # ~8 block-sized f32 buffers live at once: in/out double-buffered (4) plus
    # a few full-block temporaries (x, work, is_max/where results).
    block_budget_bytes = 16 * 1024 * 1024        # leaves headroom inside 32 MiB scoped VMEM
    bytes_per_row = T * 4 * 8
    bm = max(8, min(1024, block_budget_bytes // max(1, bytes_per_row)))
    bm = max(8, (bm // 8) * 8)
    b_ceil = ((B + 7) // 8) * 8                  # no point tiling beyond (padded) B
    return min(bm, b_ceil)


def sparse_attention(attn_s: jax.Array, top_k: int = 5) -> jax.Array:
    """JAX/Pallas equivalent of Sparse_attention(top_k).forward(attn_s)."""
    k = top_k + 1  # module does top_k += 1 in __init__
    B, T = attn_s.shape

    # time_step <= self.top_k -> identity (static shape check, like PyTorch)
    if T <= k:
        return attn_s

    bm = _choose_bm(B, T)
    B_pad = ((B + bm - 1) // bm) * bm
    x = attn_s
    if B_pad != B:
        # Zero rows are harmless: delta=eps, weights all zero, sum=eps -> zeros out.
        x = jnp.pad(x, ((0, B_pad - B), (0, 0)))

    grid = (B_pad // bm,)
    kernel = functools.partial(_sparse_attention_kernel, top_k=k)
    out = pl.pallas_call(
        kernel,
        out_shape=jax.ShapeDtypeStruct((B_pad, T), attn_s.dtype),
        grid_spec=pltpu.PrefetchScalarGridSpec(
            num_scalar_prefetch=0,
            grid=grid,
            in_specs=[pl.BlockSpec((bm, T), lambda i: (i, 0))],
            out_specs=pl.BlockSpec((bm, T), lambda i: (i, 0)),
        ),
        compiler_params=pltpu.CompilerParams(
            dimension_semantics=("parallel",),
            vmem_limit_bytes=32 * 1024 * 1024,
        ),
    )(x)

    if B_pad != B:
        out = out[:B]
    return out


def _reference(attn_s: jnp.ndarray, top_k: int = 5) -> jnp.ndarray:
    """Pure-JAX reference mirroring the PyTorch forward."""
    k = top_k + 1
    eps = 1e-7
    _, T = attn_s.shape
    if T <= k:
        return attn_s
    topk_vals = jax.lax.top_k(attn_s, k)[0]            # (B, k), sorted desc
    delta = topk_vals[:, -1:] + eps                    # (B, 1)
    attn_w = jnp.maximum(attn_s - delta, 0.0)
    attn_w_sum = jnp.sum(attn_w, axis=1, keepdims=True) + eps
    return attn_w / attn_w_sum


if __name__ == "__main__":
    key = jax.random.PRNGKey(0)

    # Lane-dense case (T multiple of 128) and a ragged case (B not multiple of 8,
    # small T) to exercise the padding path.  Both keep T > top_k+1.
    test_shapes = [(16, 128), (10, 48)]

    for B, T in test_shapes:
        key, sub = jax.random.split(key)
        logits = jax.random.normal(sub, (B, T), dtype=jnp.float32)
        attn_s = jax.nn.softmax(logits, axis=-1)

        out = jax.block_until_ready(sparse_attention(attn_s, top_k=5))
        ref = _reference(attn_s, top_k=5)

        assert out.shape == attn_s.shape and out.dtype == attn_s.dtype
        assert jnp.allclose(out, ref, atol=1e-6, rtol=1e-5), f"mismatch for shape {(B, T)}"

    print("KERNEL_OK")
</pallas_src>

<mosaic_0001>
module attributes {stable_mosaic.version = 11 : i64} {
  func.func @_sparse_attention_kernel(%arg0: i32, %arg1: memref<16x128xf32, #tpu.memory_space<vmem>>, %arg2: memref<16x128xf32, #tpu.memory_space<vmem>>) attributes {dimension_semantics = [#tpu.dimension_semantics<parallel>], iteration_bounds = array<i64: 1>, scalar_prefetch = 0 : i64, scratch_operands = 0 : i64, tpu.core_type = #tpu.core_type<tc>, window_params = [{transform_indices = @transform_0, window_bounds = array<i64: 16, 128>}, {transform_indices = @transform_1, window_bounds = array<i64: 16, 128>}]} {
    %c0 = arith.constant 0 : index
    %c0_0 = arith.constant 0 : index
    %0 = vector.load %arg1[%c0, %c0_0] : memref<16x128xf32, #tpu.memory_space<vmem>>, vector<16x128xf32>
    %cst = arith.constant 0.000000e+00 : f32
    %1 = vector.broadcast %cst : f32 to vector<16x1xf32>
    %false = arith.constant false
    %2 = vector.broadcast %false : i1 to vector<16x1xi1>
    %cst_1 = arith.constant 0.000000e+00 : f32
    %3 = vector.broadcast %cst_1 : f32 to vector<16x1xf32>
    %cst_2 = arith.constant dense<0xFF800000> : vector<16xf32>
    %4 = vector.multi_reduction <maximumf>, %0, %cst_2 [1] : vector<16x128xf32> to vector<16xf32>
    %5 = vector.shape_cast %4 : vector<16xf32> to vector<16x1xf32>
    %6 = vector.broadcast %5 : vector<16x1xf32> to vector<16x128xf32>
    %7 = arith.cmpf oeq, %0, %6 : vector<16x128xf32>
    %cst_3 = arith.constant 1.000000e+00 : f32
    %cst_4 = arith.constant 0.000000e+00 : f32
    %8 = vector.broadcast %cst_3 : f32 to vector<16x128xf32>
    %9 = vector.broadcast %cst_4 : f32 to vector<16x128xf32>
    %10 = arith.select %7, %8, %9 : vector<16x128xi1>, vector<16x128xf32>
    %cst_5 = arith.constant dense<0.000000e+00> : vector<16xf32>
    %11 = vector.multi_reduction <add>, %10, %cst_5 [1] : vector<16x128xf32> to vector<16xf32>
    %12 = vector.shape_cast %11 : vector<16xf32> to vector<16x1xf32>
    %cst_6 = arith.constant dense<true> : vector<16x1xi1>
    %13 = arith.xori %2, %cst_6 : vector<16x1xi1>
    %14 = arith.addf %1, %12 : vector<16x1xf32>
    %cst_7 = arith.constant 6.000000e+00 : f32
    %15 = vector.broadcast %cst_7 : f32 to vector<16x1xf32>
    %16 = arith.cmpf oge, %14, %15 : vector<16x1xf32>
    %17 = arith.andi %13, %16 : vector<16x1xi1>
    %18 = arith.select %17, %5, %3 : vector<16x1xi1>, vector<16x1xf32>
    %19 = arith.ori %2, %17 : vector<16x1xi1>
    %cst_8 = arith.constant 0xFF800000 : f32
    %20 = vector.broadcast %cst_8 : f32 to vector<16x128xf32>
    %21 = arith.select %7, %20, %0 : vector<16x128xi1>, vector<16x128xf32>
    %22 = arith.addf %1, %12 : vector<16x1xf32>
    %cst_9 = arith.constant dense<0xFF800000> : vector<16xf32>
    %23 = vector.multi_reduction <maximumf>, %21, %cst_9 [1] : vector<16x128xf32> to vector<16xf32>
    %24 = vector.shape_cast %23 : vector<16xf32> to vector<16x1xf32>
    %25 = vector.broadcast %24 : vector<16x1xf32> to vector<16x128xf32>
    %26 = arith.cmpf oeq, %21, %25 : vector<16x128xf32>
    %cst_10 = arith.constant 1.000000e+00 : f32
    %cst_11 = arith.constant 0.000000e+00 : f32
    %27 = vector.broadcast %cst_10 : f32 to vector<16x128xf32>
    %28 = vector.broadcast %cst_11 : f32 to vector<16x128xf32>
    %29 = arith.select %26, %27, %28 : vector<16x128xi1>, vector<16x128xf32>
    %cst_12 = arith.constant dense<0.000000e+00> : vector<16xf32>
    %30 = vector.multi_reduction <add>, %29, %cst_12 [1] : vector<16x128xf32> to vector<16xf32>
    %31 = vector.shape_cast %30 : vector<16xf32> to vector<16x1xf32>
    %cst_13 = arith.constant dense<true> : vector<16x1xi1>
    %32 = arith.xori %19, %cst_13 : vector<16x1xi1>
    %33 = arith.addf %22, %31 : vector<16x1xf32>
    %cst_14 = arith.constant 6.000000e+00 : f32
    %34 = vector.broadcast %cst_14 : f32 to vector<16x1xf32>
    %35 = arith.cmpf oge, %33, %34 : vector<16x1xf32>
    %36 = arith.andi %32, %35 : vector<16x1xi1>
    %37 = arith.select %36, %24, %18 : vector<16x1xi1>, vector<16x1xf32>
    %38 = arith.ori %19, %36 : vector<16x1xi1>
    %cst_15 = arith.constant 0xFF800000 : f32
    %39 = vector.broadcast %cst_15 : f32 to vector<16x128xf32>
    %40 = arith.select %26, %39, %21 : vector<16x128xi1>, vector<16x128xf32>
    %41 = arith.addf %22, %31 : vector<16x1xf32>
    %cst_16 = arith.constant dense<0xFF800000> : vector<16xf32>
    %42 = vector.multi_reduction <maximumf>, %40, %cst_16 [1] : vector<16x128xf32> to vector<16xf32>
    %43 = vector.shape_cast %42 : vector<16xf32> to vector<16x1xf32>
    %44 = vector.broadcast %43 : vector<16x1xf32> to vector<16x128xf32>
    %45 = arith.cmpf oeq, %40, %44 : vector<16x128xf32>
    %cst_17 = arith.constant 1.000000e+00 : f32
    %cst_18 = arith.constant 0.000000e+00 : f32
    %46 = vector.broadcast %cst_17 : f32 to vector<16x128xf32>
    %47 = vector.broadcast %cst_18 : f32 to vector<16x128xf32>
    %48 = arith.select %45, %46, %47 : vector<16x128xi1>, vector<16x128xf32>
    %cst_19 = arith.constant dense<0.000000e+00> : vector<16xf32>
    %49 = vector.multi_reduction <add>, %48, %cst_19 [1] : vector<16x128xf32> to vector<16xf32>
    %50 = vector.shape_cast %49 : vector<16xf32> to vector<16x1xf32>
    %cst_20 = arith.constant dense<true> : vector<16x1xi1>
    %51 = arith.xori %38, %cst_20 : vector<16x1xi1>
    %52 = arith.addf %41, %50 : vector<16x1xf32>
    %cst_21 = arith.constant 6.000000e+00 : f32
    %53 = vector.broadcast %cst_21 : f32 to vector<16x1xf32>
    %54 = arith.cmpf oge, %52, %53 : vector<16x1xf32>
    %55 = arith.andi %51, %54 : vector<16x1xi1>
    %56 = arith.select %55, %43, %37 : vector<16x1xi1>, vector<16x1xf32>
    %57 = arith.ori %38, %55 : vector<16x1xi1>
    %cst_22 = arith.constant 0xFF800000 : f32
    %58 = vector.broadcast %cst_22 : f32 to vector<16x128xf32>
    %59 = arith.select %45, %58, %40 : vector<16x128xi1>, vector<16x128xf32>
    %60 = arith.addf %41, %50 : vector<16x1xf32>
    %cst_23 = arith.constant dense<0xFF800000> : vector<16xf32>
    %61 = vector.multi_reduction <maximumf>, %59, %cst_23 [1] : vector<16x128xf32> to vector<16xf32>
    %62 = vector.shape_cast %61 : vector<16xf32> to vector<16x1xf32>
    %63 = vector.broadcast %62 : vector<16x1xf32> to vector<16x128xf32>
    %64 = arith.cmpf oeq, %59, %63 : vector<16x128xf32>
    %cst_24 = arith.constant 1.000000e+00 : f32
    %cst_25 = arith.constant 0.000000e+00 : f32
    %65 = vector.broadcast %cst_24 : f32 to vector<16x128xf32>
    %66 = vector.broadcast %cst_25 : f32 to vector<16x128xf32>
    %67 = arith.select %64, %65, %66 : vector<16x128xi1>, vector<16x128xf32>
    %cst_26 = arith.constant dense<0.000000e+00> : vector<16xf32>
    %68 = vector.multi_reduction <add>, %67, %cst_26 [1] : vector<16x128xf32> to vector<16xf32>
    %69 = vector.shape_cast %68 : vector<16xf32> to vector<16x1xf32>
    %cst_27 = arith.constant dense<true> : vector<16x1xi1>
    %70 = arith.xori %57, %cst_27 : vector<16x1xi1>
    %71 = arith.addf %60, %69 : vector<16x1xf32>
    %cst_28 = arith.constant 6.000000e+00 : f32
    %72 = vector.broadcast %cst_28 : f32 to vector<16x1xf32>
    %73 = arith.cmpf oge, %71, %72 : vector<16x1xf32>
    %74 = arith.andi %70, %73 : vector<16x1xi1>
    %75 = arith.select %74, %62, %56 : vector<16x1xi1>, vector<16x1xf32>
    %76 = arith.ori %57, %74 : vector<16x1xi1>
    %cst_29 = arith.constant 0xFF800000 : f32
    %77 = vector.broadcast %cst_29 : f32 to vector<16x128xf32>
    %78 = arith.select %64, %77, %59 : vector<16x128xi1>, vector<16x128xf32>
    %79 = arith.addf %60, %69 : vector<16x1xf32>
    %cst_30 = arith.constant dense<0xFF800000> : vector<16xf32>
    %80 = vector.multi_reduction <maximumf>, %78, %cst_30 [1] : vector<16x128xf32> to vector<16xf32>
    %81 = vector.shape_cast %80 : vector<16xf32> to vector<16x1xf32>
    %82 = vector.broadcast %81 : vector<16x1xf32> to vector<16x128xf32>
    %83 = arith.cmpf oeq, %78, %82 : vector<16x128xf32>
    %cst_31 = arith.constant 1.000000e+00 : f32
    %cst_32 = arith.constant 0.000000e+00 : f32
    %84 = vector.broadcast %cst_31 : f32 to vector<16x128xf32>
    %85 = vector.broadcast %cst_32 : f32 to vector<16x128xf32>
    %86 = arith.select %83, %84, %85 : vector<16x128xi1>, vector<16x128xf32>
    %cst_33 = arith.constant dense<0.000000e+00> : vector<16xf32>
    %87 = vector.multi_reduction <add>, %86, %cst_33 [1] : vector<16x128xf32> to vector<16xf32>
    %88 = vector.shape_cast %87 : vector<16xf32> to vector<16x1xf32>
    %cst_34 = arith.constant dense<true> : vector<16x1xi1>
    %89 = arith.xori %76, %cst_34 : vector<16x1xi1>
    %90 = arith.addf %79, %88 : vector<16x1xf32>
    %cst_35 = arith.constant 6.000000e+00 : f32
    %91 = vector.broadcast %cst_35 : f32 to vector<16x1xf32>
    %92 = arith.cmpf oge, %90, %91 : vector<16x1xf32>
    %93 = arith.andi %89, %92 : vector<16x1xi1>
    %94 = arith.select %93, %81, %75 : vector<16x1xi1>, vector<16x1xf32>
    %95 = arith.ori %76, %93 : vector<16x1xi1>
    %cst_36 = arith.constant 0xFF800000 : f32
    %96 = vector.broadcast %cst_36 : f32 to vector<16x128xf32>
    %97 = arith.select %83, %96, %78 : vector<16x128xi1>, vector<16x128xf32>
    %98 = arith.addf %79, %88 : vector<16x1xf32>
    %cst_37 = arith.constant dense<0xFF800000> : vector<16xf32>
    %99 = vector.multi_reduction <maximumf>, %97, %cst_37 [1] : vector<16x128xf32> to vector<16xf32>
    %100 = vector.shape_cast %99 : vector<16xf32> to vector<16x1xf32>
    %101 = vector.broadcast %100 : vector<16x1xf32> to vector<16x128xf32>
    %102 = arith.cmpf oeq, %97, %101 : vector<16x128xf32>
    %cst_38 = arith.constant 1.000000e+00 : f32
    %cst_39 = arith.constant 0.000000e+00 : f32
    %103 = vector.broadcast %cst_38 : f32 to vector<16x128xf32>
    %104 = vector.broadcast %cst_39 : f32 to vector<16x128xf32>
    %105 = arith.select %102, %103, %104 : vector<16x128xi1>, vector<16x128xf32>
    %cst_40 = arith.constant dense<0.000000e+00> : vector<16xf32>
    %106 = vector.multi_reduction <add>, %105, %cst_40 [1] : vector<16x128xf32> to vector<16xf32>
    %107 = vector.shape_cast %106 : vector<16xf32> to vector<16x1xf32>
    %cst_41 = arith.constant dense<true> : vector<16x1xi1>
    %108 = arith.xori %95, %cst_41 : vector<16x1xi1>
    %109 = arith.addf %98, %107 : vector<16x1xf32>
    %cst_42 = arith.constant 6.000000e+00 : f32
    %110 = vector.broadcast %cst_42 : f32 to vector<16x1xf32>
    %111 = arith.cmpf oge, %109, %110 : vector<16x1xf32>
    %112 = arith.andi %108, %111 : vector<16x1xi1>
    %113 = arith.select %112, %100, %94 : vector<16x1xi1>, vector<16x1xf32>
    %cst_43 = arith.constant 1.000000e-07 : f32
    %114 = vector.broadcast %cst_43 : f32 to vector<16x1xf32>
    %115 = arith.addf %113, %114 : vector<16x1xf32>
    %116 = vector.broadcast %115 : vector<16x1xf32> to vector<16x128xf32>
    %117 = arith.subf %0, %116 : vector<16x128xf32>
    %cst_44 = arith.constant 0.000000e+00 : f32
    %118 = vector.broadcast %cst_44 : f32 to vector<16x128xf32>
    %119 = arith.maximumf %117, %118 : vector<16x128xf32>
    %cst_45 = arith.constant dense<0.000000e+00> : vector<16xf32>
    %120 = vector.multi_reduction <add>, %119, %cst_45 [1] : vector<16x128xf32> to vector<16xf32>
    %121 = vector.shape_cast %120 : vector<16xf32> to vector<16x1xf32>
    %cst_46 = arith.constant 1.000000e-07 : f32
    %122 = vector.broadcast %cst_46 : f32 to vector<16x1xf32>
    %123 = arith.addf %121, %122 : vector<16x1xf32>
    %124 = tpu.reciprocal %123 : vector<16x1xf32> -> vector<16x1xf32>
    %125 = vector.broadcast %124 : vector<16x1xf32> to vector<16x128xf32>
    %126 = arith.mulf %119, %125 : vector<16x128xf32>
    %c0_47 = arith.constant 0 : index
    %c0_48 = arith.constant 0 : index
    %127 = vector.load %arg2[%c0_47, %c0_48] : memref<16x128xf32, #tpu.memory_space<vmem>>, vector<16x128xf32>
    tpu.vector_store %arg2[%c0_47, %c0_48], %126 {strides = array<i32>} : memref<16x128xf32, #tpu.memory_space<vmem>>, vector<16x128xf32>,
    return
  }
  func.func @transform_0(%arg0: i32) -> (i32, i32) {
    %c0_i32 = arith.constant 0 : i32
    %c0_i32_0 = arith.constant 0 : i32
    return %arg0, %c0_i32 : i32, i32
  }
  func.func @transform_1(%arg0: i32) -> (i32, i32) {
    %c0_i32 = arith.constant 0 : i32
    %c0_i32_0 = arith.constant 0 : i32
    return %arg0, %c0_i32 : i32, i32
  }
}

</mosaic_0001>

<llo_original>
// kernel: tpu_custom_call.1
$region0: #{tpu_custom_call.1}
  #allocation0 [shape = 'u32[]', space=smem, size = 0x4, offset = 0x4, fixed_abs, tag = 'smem constant byte address 0x4 - core index']
  #allocation1 [shape = 'u32[144,128]{1,0:T(1,128)}', space=vmem, size = 0x12000, scoped, tag = 'internal scratch']
  %s0 = inlined_call_operand.hbm [shape: f32[16,128], index: 0, kind: input, shape index: {}]
  %s1 = inlined_call_operand.hbm [shape: f32[16,128], index: 1, kind: output, shape index: {}]
  %s2 = sld [smem:[#allocation0]]
  $region18: #{tpu_custom_call.1} parent=0
    _
  %s4 = ssub.s32 1, %s2
  %s5 = scalar_select 0, %s4, %s2
  $region1: #{tpu_custom_call.1} parent=0
    #allocation2 [shape = 'u8[8192]{0}', space=vmem, size = 0x2000, scoped, tag = 'input window, operand 0, single buffered']
    #allocation3 [shape = 's32[1]{0}', space=sflag, size = 0x4, scoped, tag = 'scoped memory for tpu_custom_call.1']
    #allocation4 [shape = 's32[1]{0}', space=sflag, size = 0x4, scoped, tag = 'scoped memory for tpu_custom_call.1']
    #allocation5 [shape = 'u8[8192]{0}', space=vmem, size = 0x2000, scoped, tag = 'output window, operand 0, single buffered']
    %6 = vsyncpa [#allocation3], 0
    %7 = vsyncpa [#allocation4], 0
    // Predicated region
    $region2: #{tpu_custom_call.1} parent=1 // pred_check
      _
    $region3: #{tpu_custom_call.1} parent=1 // pred_check_branch
      %9 = sbr.rel (0) target = $region5
    $region4: #{tpu_custom_call.1} parent=1 // pred_region
      %s11 = ssub.s32 256, 256
      %12 = vsyncadd [#allocation3], %s11
      %s13 = sshll.u32 [#allocation2], 4
      %s14 = int_to_ptr.vmem [resolvable:$true] %s13
      %19 = dma.hbm_to_vmem [thread:$0]  %s0, 256, %s14, [#allocation3], 128, 128, 8
    $region5: #{tpu_custom_call.1} parent=1 // pred_fallthru
      _
    // Predicated region
    $region6: #{tpu_custom_call.1} parent=1 // pred_check
      _
    $region7: #{tpu_custom_call.1} parent=1 // pred_check_branch
      %21 = sbr.rel (0) target = $region9
    $region8: #{tpu_custom_call.1} parent=1 // pred_region
      %22 = dma.done [#allocation3], 256
    $region9: #{tpu_custom_call.1} parent=1 // pred_fallthru
      _
    %v23 = vld [vmem:[#allocation2] sm:$0xff]
    %v24 = vld [vmem:[#allocation2 + $0x8] sm:$0xff]
    %25 = vmax.xlane.f32.xlu0 %v23
    %v26 = vpop.xlane.xlu0 %25
    %27 = vmax.xlane.f32.xlu0 %v24
    %v28 = vpop.xlane.xlu0 %27
    %vm29 = vcmp.eq.f32.partialorder %v23, %v26
    %vm30 = vcmp.eq.f32.partialorder %v24, %v28
    %v31 = vsel %vm29, 1.0, 0.0
    %v32 = vsel %vm30, 1.0, 0.0
    %33 = vadd.xlane.f32.xlu0 %v31
    %v34 = vpop.xlane.xlu0 %33
    %35 = vadd.xlane.f32.xlu0 %v32
    %v36 = vpop.xlane.xlu0 %35
    %v37 = vadd.f32 %v34, 0.0
    %v38 = vadd.f32 %v36, 0.0
    %vm39 = vcmp.ge.f32.partialorder %v37, 6.0
    %vm40 = vcmp.ge.f32.partialorder %v38, 6.0
    %v41 = vsel %vm39, %v26, 0.0
    %v42 = vsel %vm40, %v28, 0.0
    %v43 = vsel %vm29, -inf, %v23
    %v44 = vsel %vm30, -inf, %v24
    %45 = vmax.xlane.f32.xlu0 %v43
    %v46 = vpop.xlane.xlu0 %45
    %47 = vmax.xlane.f32.xlu0 %v44
    %v48 = vpop.xlane.xlu0 %47
    %vm49 = vcmp.eq.f32.partialorder %v43, %v46
    %vm50 = vcmp.eq.f32.partialorder %v44, %v48
    %v51 = vsel %vm49, 1.0, 0.0
    %v52 = vsel %vm50, 1.0, 0.0
    %53 = vadd.xlane.f32.xlu0 %v51
    %v54 = vpop.xlane.xlu0 %53
    %55 = vadd.xlane.f32.xlu0 %v52
    %v56 = vpop.xlane.xlu0 %55
    %vm57 = vmxor %vm39, 1
    %vm58 = vmxor %vm40, 1
    %v59 = vadd.f32 %v37, %v54
    %v60 = vadd.f32 %v38, %v56
    %vm61 = vcmp.ge.f32.partialorder %v59, 6.0
    %vm62 = vcmp.ge.f32.partialorder %v60, 6.0
    %vm63 = vmand %vm57, %vm61
    %vm64 = vmand %vm58, %vm62
    %v65 = vsel %vm63, %v46, %v41
    %v66 = vsel %vm64, %v48, %v42
    %vm67 = vmor %vm39, %vm63
    %vm68 = vmor %vm40, %vm64
    %v69 = vsel %vm49, -inf, %v43
    %v70 = vsel %vm50, -inf, %v44
    %71 = vmax.xlane.f32.xlu0 %v69
    %v72 = vpop.xlane.xlu0 %71
    %73 = vmax.xlane.f32.xlu0 %v70
    %v74 = vpop.xlane.xlu0 %73
    %vm75 = vcmp.eq.f32.partialorder %v69, %v72
    %vm76 = vcmp.eq.f32.partialorder %v70, %v74
    %v77 = vsel %vm75, 1.0, 0.0
    %v78 = vsel %vm76, 1.0, 0.0
    %79 = vadd.xlane.f32.xlu0 %v77
    %v80 = vpop.xlane.xlu0 %79
    %81 = vadd.xlane.f32.xlu0 %v78
    %v82 = vpop.xlane.xlu0 %81
    %vm83 = vmxor %vm67, 1
    %vm84 = vmxor %vm68, 1
    %v85 = vadd.f32 %v59, %v80
    %v86 = vadd.f32 %v60, %v82
    %vm87 = vcmp.ge.f32.partialorder %v85, 6.0
    %vm88 = vcmp.ge.f32.partialorder %v86, 6.0
    %vm89 = vmand %vm83, %vm87
    %vm90 = vmand %vm84, %vm88
    %v91 = vsel %vm89, %v72, %v65
    %v92 = vsel %vm90, %v74, %v66
    %vm93 = vmor %vm67, %vm89
    %vm94 = vmor %vm68, %vm90
    %v95 = vsel %vm75, -inf, %v69
    %v96 = vsel %vm76, -inf, %v70
    %97 = vmax.xlane.f32.xlu0 %v95
    %v98 = vpop.xlane.xlu0 %97
    %99 = vmax.xlane.f32.xlu0 %v96
    %v100 = vpop.xlane.xlu0 %99
    %vm101 = vcmp.eq.f32.partialorder %v95, %v98
    %vm102 = vcmp.eq.f32.partialorder %v96, %v100
    %v103 = vsel %vm101, 1.0, 0.0
    %v104 = vsel %vm102, 1.0, 0.0
    %105 = vadd.xlane.f32.xlu0 %v103
    %v106 = vpop.xlane.xlu0 %105
    %107 = vadd.xlane.f32.xlu0 %v104
    %v108 = vpop.xlane.xlu0 %107
    %vm109 = vmxor %vm93, 1
    %vm110 = vmxor %vm94, 1
    %v111 = vadd.f32 %v85, %v106
    %v112 = vadd.f32 %v86, %v108
    %vm113 = vcmp.ge.f32.partialorder %v111, 6.0
    %vm114 = vcmp.ge.f32.partialorder %v112, 6.0
    %vm115 = vmand %vm109, %vm113
    %vm116 = vmand %vm110, %vm114
    %v117 = vsel %vm115, %v98, %v91
    %v118 = vsel %vm116, %v100, %v92
    %vm119 = vmor %vm93, %vm115
    %vm120 = vmor %vm94, %vm116
    %v121 = vsel %vm101, -inf, %v95
    %v122 = vsel %vm102, -inf, %v96
    %123 = vmax.xlane.f32.xlu0 %v121
    %v124 = vpop.xlane.xlu0 %123
    %125 = vmax.xlane.f32.xlu0 %v122
    %v126 = vpop.xlane.xlu0 %125
    %vm127 = vcmp.eq.f32.partialorder %v121, %v124
    %vm128 = vcmp.eq.f32.partialorder %v122, %v126
    %v129 = vsel %vm127, 1.0, 0.0
    %v130 = vsel %vm128, 1.0, 0.0
    %131 = vadd.xlane.f32.xlu0 %v129
    %v132 = vpop.xlane.xlu0 %131
    %133 = vadd.xlane.f32.xlu0 %v130
    %v134 = vpop.xlane.xlu0 %133
    %vm135 = vmxor %vm119, 1
    %vm136 = vmxor %vm120, 1
    %v137 = vadd.f32 %v111, %v132
    %v138 = vadd.f32 %v112, %v134
    %vm139 = vcmp.ge.f32.partialorder %v137, 6.0
    %vm140 = vcmp.ge.f32.partialorder %v138, 6.0
    %vm141 = vmand %vm135, %vm139
    %vm142 = vmand %vm136, %vm140
    %v143 = vsel %vm141, %v124, %v117
    %v144 = vsel %vm142, %v126, %v118
    %vm145 = vmor %vm119, %vm141
    %vm146 = vmor %vm120, %vm142
    %v147 = vsel %vm127, -inf, %v121
    %v148 = vsel %vm128, -inf, %v122
    %149 = vmax.xlane.f32.xlu0 %v147
    %v150 = vpop.xlane.xlu0 %149
    %151 = vmax.xlane.f32.xlu0 %v148
    %v152 = vpop.xlane.xlu0 %151
    %vm153 = vcmp.eq.f32.partialorder %v147, %v150
    %vm154 = vcmp.eq.f32.partialorder %v148, %v152
    %v155 = vsel %vm153, 1.0, 0.0
    %v156 = vsel %vm154, 1.0, 0.0
    %157 = vadd.xlane.f32.xlu0 %v155
    %v158 = vpop.xlane.xlu0 %157
    %159 = vadd.xlane.f32.xlu0 %v156
    %v160 = vpop.xlane.xlu0 %159
    %vm161 = vmxor %vm145, 1
    %vm162 = vmxor %vm146, 1
    %v163 = vadd.f32 %v137, %v158
    %v164 = vadd.f32 %v138, %v160
    %vm165 = vcmp.ge.f32.partialorder %v163, 6.0
    %vm166 = vcmp.ge.f32.partialorder %v164, 6.0
    %vm167 = vmand %vm161, %vm165
    %vm168 = vmand %vm162, %vm166
    %v169 = vsel %vm167, %v150, %v143
    %v170 = vsel %vm168, %v152, %v144
    %v171 = vadd.f32 %v169, 1e-07
    %v172 = vadd.f32 %v170, 1e-07
    %v173 = vsub.f32 %v23, %v171
    %v174 = vsub.f32 %v24, %v172
    %v175 = vmax.f32 %v173, 0.0
    %v176 = vmax.f32 %v174, 0.0
    %177 = vadd.xlane.f32.xlu0 %v175
    %v178 = vpop.xlane.xlu0 %177
    %179 = vadd.xlane.f32.xlu0 %v176
    %v180 = vpop.xlane.xlu0 %179
    %v181 = vadd.f32 %v178, 1e-07
    %v182 = vadd.f32 %v180, 1e-07
    %v183 = vrcp.pop %v181
    %v184 = vrcp.pop %v182
    %v185 = vmul.f32 %v175, %v183
    %v186 = vmul.f32 %v176, %v184
    %187 = vst [vmem:[#allocation5] sm:$0xff] %v185
    %188 = vst [vmem:[#allocation5 + $0x8] sm:$0xff] %v186
    // Predicated region
    $region10: #{tpu_custom_call.1} parent=1 // pred_check
      _
    $region11: #{tpu_custom_call.1} parent=1 // pred_check_branch
      %190 = sbr.rel (0) target = $region13
    $region12: #{tpu_custom_call.1} parent=1 // pred_region
      %s192 = ssub.s32 256, 256
      %193 = vsyncadd [#allocation4], %s192
      %s194 = sshll.u32 [#allocation5], 4
      %s195 = int_to_ptr.vmem [resolvable:$true] %s194
      %200 = dma.vmem_to_hbm [thread:$0]  %s195, 256, %s1, [#allocation4], 128, 128, 8
    $region13: #{tpu_custom_call.1} parent=1 // pred_fallthru
      _
    // Predicated region
    $region14: #{tpu_custom_call.1} parent=1 // pred_check
      _
    $region15: #{tpu_custom_call.1} parent=1 // pred_check_branch
      %202 = sbr.rel (0) target = $region17
    $region16: #{tpu_custom_call.1} parent=1 // pred_region
      %203 = dma.done [#allocation4], 256
    $region17: #{tpu_custom_call.1} parent=1 // pred_fallthru
      _
    %204 = vsyncpa [#allocation3], 1
    %205 = vsyncpa [#allocation4], 1

</llo_original>
